<compile_context>
chip_gen: v5e
topology: v5e:2x2
jax: 0.10.0
libtpu: 0.0.40
codegen_flags: <defaults>
</compile_context>

<pallas_src>
import functools

import numpy as np

import jax
import jax.numpy as jnp
from jax.experimental import pallas as pl
from jax.experimental.pallas import tpu as pltpu


# ----------------------------------------------------------------------------
# Host-built constant layout matrices (0/1, applied with exact f32 matmuls)
# ----------------------------------------------------------------------------
def _round_up(x, m):
    return (x + m - 1) // m * m


def _scatter_to_padded(H, W, wp, L):
    """(H*W, L): x_flat @ M puts pixel (h, w) at padded flat (h+1)*wp + (w+1);
    every other column (border ring / lane padding) stays exactly 0."""
    m = np.zeros((H * W, L), np.float32)
    for h in range(H):
        for w in range(W):
            m[h * W + w, (h + 1) * wp + (w + 1)] = 1.0
    return jnp.asarray(m)


def _pool_select(HO, WO, wp_src, wp_dst, L_src, L_dst):
    """(L_src, L_dst): picks the 2x2-window max computed at source position
    (2h+1, 2w+1) of the old padded grid and writes it to interior (h+1, w+1)
    of the pooled padded grid (all other destinations stay 0 == padding)."""
    m = np.zeros((L_src, L_dst), np.float32)
    for h in range(HO):
        for w in range(WO):
            m[(2 * h + 1) * wp_src + (2 * w + 1),
              (h + 1) * wp_dst + (w + 1)] = 1.0
    return jnp.asarray(m)


def _gather_interior(HO, WO, wp_src, L_src):
    """(L_src, HO*WO): strips the padding ring of the final padded grid."""
    m = np.zeros((L_src, HO * WO), np.float32)
    for h in range(HO):
        for w in range(WO):
            m[(h + 1) * wp_src + (w + 1), h * WO + w] = 1.0
    return jnp.asarray(m)


def _interior_mask(H, W, wp, L):
    m = np.zeros((1, L), np.float32)
    for h in range(H):
        for w in range(W):
            m[0, (h + 1) * wp + (w + 1)] = 1.0
    return jnp.asarray(m)


def _flatten_weight(w_hwio):
    """(3,3,cin,cout) HWIO -> (cout, 9*cin), tap-major / channel-minor,
    matching the im2col row order (row = (kh*3+kw)*cin + c)."""
    cout = w_hwio.shape[-1]
    return jnp.transpose(w_hwio, (3, 0, 1, 2)).reshape(cout, -1)


# ----------------------------------------------------------------------------
# Fused Pallas kernel: Conv-ReLU, Conv-ReLU, MaxPool2, Conv-ReLU per image
# ----------------------------------------------------------------------------
def _vgg_features_kernel(x_ref, w0_ref, w1_ref, w2_ref, b0_ref, b1_ref, b2_ref,
                         pin_ref, spool_ref, sout_ref, mask_ref,
                         o_ref, col_ref,
                         *, cins, L1, WP1, L2, WP2, roll_sign):
    f32 = jnp.float32

    def conv3x3_relu(x_pad, w_ref, b_ref, L, Wp, cin):
        # im2col via 9 lane rotations of the flat zero-padded grid (XLU work,
        # no reshapes/relayouts), written once into the VMEM scratch; then a
        # single MXU matmul W(cout, 9*cin) @ patches(9*cin, L) with L >= 128
        # lanes.  Flat-wrap garbage only lands on border/tail positions that
        # are masked or never read downstream.
        for kh in range(3):
            for kw in range(3):
                t = kh * 3 + kw
                d = (kh - 1) * Wp + (kw - 1)               # flat tap offset
                shift = (roll_sign * d) % L
                tap = x_pad if shift == 0 else pltpu.roll(x_pad, shift=shift,
                                                          axis=1)
                col_ref[t * cin:(t + 1) * cin, 0:L] = tap
        patches = col_ref[0:9 * cin, 0:L].astype(w_ref.dtype)  # bf16 on v6e/v7x
        y = jnp.dot(w_ref[...], patches, preferred_element_type=f32)
        return jnp.maximum(y + b_ref[...].astype(f32), 0.0)   # bias+ReLU in f32

    # stage 0: scatter the (C0, H*W) input into the zero-bordered flat grid.
    x0 = jnp.dot(x_ref[0].astype(f32), pin_ref[...], preferred_element_type=f32)

    # conv0 + ReLU; one masked multiply re-creates the zero padding ring (and
    # zeroes the wrap garbage) so it is a valid padded input for conv1.
    y0 = conv3x3_relu(x0, w0_ref, b0_ref, L1, WP1, cins[0]) * mask_ref[...]

    # conv1 + ReLU (its border garbage is never read downstream).
    y1 = conv3x3_relu(y0, w1_ref, b1_ref, L1, WP1, cins[1])

    # fused 2x2 / stride-2 maxpool: two roll+max passes compute every 2x2
    # window max; one constant 0/1 matmul then subsamples the window maxima
    # AND re-pads them into the (H/2+2)*(W/2+2) flat grid for conv2.
    m = jnp.maximum(y1, pltpu.roll(y1, shift=(roll_sign * 1) % L1, axis=1))
    m = jnp.maximum(m, pltpu.roll(m, shift=(roll_sign * WP1) % L1, axis=1))
    x2 = jnp.dot(m, spool_ref[...], preferred_element_type=f32)

    # conv2 + ReLU, then gather the valid interior -> (C3, (H/2)*(W/2)).
    y2 = conv3x3_relu(x2, w2_ref, b2_ref, L2, WP2, cins[2])
    o_ref[0] = jnp.dot(y2, sout_ref[...],
                       preferred_element_type=f32).astype(o_ref.dtype)


# ----------------------------------------------------------------------------
# Wrapper
# ----------------------------------------------------------------------------
def vgg_loss_forward(x_nchw, params, *, roll_sign=-1,
                     compute_dtype=jnp.float32):
    """features[:-3] forward.  x_nchw: (N, C0, H, W) NCHW (PyTorch layout)."""
    N, C0, H, W = x_nchw.shape
    assert H % 2 == 0 and W % 2 == 0, "2x2/2 maxpool needs even spatial dims"
    (w0, b0), (w1, b1), (w2, b2) = params
    c1, c2, c3 = w0.shape[-1], w1.shape[-1], w2.shape[-1]
    assert w0.shape[2] == C0 and w1.shape[2] == c1 and w2.shape[2] == c2

    WP1 = W + 2
    HO, WO = H // 2, W // 2
    WP2 = WO + 2
    L1 = _round_up((H + 2) * WP1, 128)       # flat padded grid, lane-aligned
    L2 = _round_up((HO + 2) * WP2, 128)
    LI, LO = H * W, HO * WO

    # constant layout matrices (built at trace time, exact 0/1 f32)
    p_in = _scatter_to_padded(H, W, WP1, L1)           # (LI, L1)  pad input
    s_pool = _pool_select(HO, WO, WP1, WP2, L1, L2)    # (L1, L2)  pool+re-pad
    s_out = _gather_interior(HO, WO, WP2, L2)          # (L2, LO)  strip pad
    mask1 = _interior_mask(H, W, WP1, L1)              # (1, L1)

    w0f = _flatten_weight(w0).astype(compute_dtype)    # (c1, 9*C0)
    w1f = _flatten_weight(w1).astype(compute_dtype)    # (c2, 9*c1)
    w2f = _flatten_weight(w2).astype(compute_dtype)    # (c3, 9*c2)
    b0c, b1c, b2c = (b.reshape(-1, 1).astype(jnp.float32)
                     for b in (b0, b1, b2))

    x_flat = x_nchw.reshape(N, C0, LI)                 # free reshape (NCHW)

    kernel = functools.partial(
        _vgg_features_kernel,
        cins=(C0, c1, c2), L1=L1, WP1=WP1, L2=L2, WP2=WP2,
        roll_sign=roll_sign)

    out_flat = pl.pallas_call(
        kernel,
        out_shape=jax.ShapeDtypeStruct((N, c3, LO), x_nchw.dtype),
        grid=(N,),
        in_specs=[
            pl.BlockSpec((1, C0, LI), lambda n: (n, 0, 0)),   # per-image input
            # weights / biases / layout constants: constant index maps ->
            # DMA'd once, VMEM-resident across all grid steps.
            pl.BlockSpec(w0f.shape, lambda n: (0, 0)),
            pl.BlockSpec(w1f.shape, lambda n: (0, 0)),
            pl.BlockSpec(w2f.shape, lambda n: (0, 0)),
            pl.BlockSpec(b0c.shape, lambda n: (0, 0)),
            pl.BlockSpec(b1c.shape, lambda n: (0, 0)),
            pl.BlockSpec(b2c.shape, lambda n: (0, 0)),
            pl.BlockSpec(p_in.shape, lambda n: (0, 0)),
            pl.BlockSpec(s_pool.shape, lambda n: (0, 0)),
            pl.BlockSpec(s_out.shape, lambda n: (0, 0)),
            pl.BlockSpec(mask1.shape, lambda n: (0, 0)),
        ],
        out_specs=pl.BlockSpec((1, c3, LO), lambda n: (n, 0, 0)),
        scratch_shapes=[
            # shared im2col buffer (f32; operands cast to compute_dtype at the
            # dot so bf16 mode never needs packed sub-tile stores)
            pltpu.VMEM((9 * max(C0, c1, c2), L1), jnp.float32),
        ],
        compiler_params=pltpu.CompilerParams(
            dimension_semantics=("parallel",)),        # batch across TCs (v7x)
    )(x_flat, w0f, w1f, w2f, b0c, b1c, b2c, p_in, s_pool, s_out, mask1)

    return out_flat.reshape(N, c3, HO, WO)


# ----------------------------------------------------------------------------
# pltpu.roll direction probe (run once, outside jit) so the in-kernel flat
# shifts are direction-proof: returns s such that
#   pltpu.roll(x, shift=(s*d) % L, axis=-1)[..., p] == x[..., (p + d) % L].
# ----------------------------------------------------------------------------
def _probe_roll_sign():
    def k(x_ref, o_ref):
        o_ref[...] = pltpu.roll(x_ref[...], shift=1, axis=1)

    x = jnp.tile(jnp.arange(128, dtype=jnp.float32)[None, :], (8, 1))
    y = pl.pallas_call(
        k, out_shape=jax.ShapeDtypeStruct((8, 128), jnp.float32))(x)
    return -1 if float(y[0, 0]) == 127.0 else 1       # jnp.roll semantics -> -1


# ----------------------------------------------------------------------------
# Synthetic parameters + pure-JAX reference (same truncated feature stack)
# ----------------------------------------------------------------------------
def init_vgg_loss_params(key, dtype=jnp.float32):
    # channel plan of the layers kept by features[:-3]: 4->8, 8->8, pool, 8->16
    dims = [(4, 8), (8, 8), (8, 16)]
    params = []
    for i, (cin, cout) in enumerate(dims):
        wkey = jax.random.fold_in(key, i)
        w = jax.random.normal(wkey, (3, 3, cin, cout), dtype) * (
            2.0 / (9.0 * cin)) ** 0.5
        b = jnp.zeros((cout,), dtype)
        params.append((w, b))
    return params


def vgg_loss_reference(x_nchw, params):
    def conv(x, w, b):
        y = jax.lax.conv_general_dilated(
            x, w, window_strides=(1, 1), padding=((1, 1), (1, 1)),
            dimension_numbers=("NCHW", "HWIO", "NCHW"),
            precision=jax.lax.Precision.HIGHEST)
        return jax.nn.relu(y + b.reshape(1, -1, 1, 1))

    x = conv(x_nchw.astype(jnp.float32), *params[0])
    x = conv(x, *params[1])
    x = jax.lax.reduce_window(x, -jnp.inf, jax.lax.max,
                              (1, 1, 2, 2), (1, 1, 2, 2), "VALID")
    return conv(x, *params[2])


if __name__ == "__main__":
    key = jax.random.PRNGKey(0)
    xkey, pkey = jax.random.split(key)
    x = jax.random.normal(xkey, (2, 4, 16, 16), jnp.float32)    # NCHW
    params = init_vgg_loss_params(pkey)

    roll_sign = _probe_roll_sign()

    # f32 MXU operands (exact path; also the v5e-safe default)
    fwd = jax.jit(functools.partial(vgg_loss_forward, roll_sign=roll_sign,
                                    compute_dtype=jnp.float32))
    out = jax.block_until_ready(fwd(x, params))
    assert out.shape == (2, 16, 8, 8), out.shape
    assert bool(jnp.all(jnp.isfinite(out)))

    ref = jax.block_until_ready(vgg_loss_reference(x, params))
    assert bool(jnp.allclose(out, ref, rtol=2e-2, atol=2e-2)), (
        float(jnp.max(jnp.abs(out - ref))))

    # bf16 MXU-operand path (full-rate MXU on v6e/v7x); accumulation stays f32
    fwd_bf16 = jax.jit(functools.partial(vgg_loss_forward, roll_sign=roll_sign,
                                         compute_dtype=jnp.bfloat16))
    out_bf16 = jax.block_until_ready(fwd_bf16(x, params))
    assert out_bf16.shape == (2, 16, 8, 8)
    assert bool(jnp.allclose(out_bf16, ref, rtol=1e-1, atol=1e-1))

    print("KERNEL_OK")
</pallas_src>

<mosaic_0001>
module attributes {stable_mosaic.version = 11 : i64} {
  func.func @k(%arg0: memref<8x128xf32, #tpu.memory_space<vmem>>, %arg1: memref<8x128xf32, #tpu.memory_space<vmem>>) attributes {dimension_semantics = [], scalar_prefetch = 0 : i64, scratch_operands = 0 : i64, tpu.core_type = #tpu.core_type<tc>} {
    %c0 = arith.constant 0 : index
    %c0_0 = arith.constant 0 : index
    %0 = vector.load %arg0[%c0, %c0_0] : memref<8x128xf32, #tpu.memory_space<vmem>>, vector<8x128xf32>
    %c1_i32 = arith.constant 1 : i32
    %1 = tpu.dynamic_rotate %0 by %c1_i32 dim 1 : vector<8x128xf32>, i32 -> vector<8x128xf32>
    %c0_1 = arith.constant 0 : index
    %c0_2 = arith.constant 0 : index
    %2 = vector.load %arg1[%c0_1, %c0_2] : memref<8x128xf32, #tpu.memory_space<vmem>>, vector<8x128xf32>
    tpu.vector_store %arg1[%c0_1, %c0_2], %1 {strides = array<i32>} : memref<8x128xf32, #tpu.memory_space<vmem>>, vector<8x128xf32>,
    return
  }
}

</mosaic_0001>

<llo_original>
// kernel: tpu_custom_call.1
$region0: #{tpu_custom_call.1}
  #allocation0 [shape = 'u32[]', space=smem, size = 0x4, offset = 0x4, fixed_abs, tag = 'smem constant byte address 0x4 - core index']
  #allocation1 [shape = 'u32[72,128]{1,0:T(1,128)}', space=vmem, size = 0x9000, scoped, tag = 'internal scratch']
  %s0 = inlined_call_operand.hbm [shape: f32[8,128], index: 0, kind: input, shape index: {}]
  %s1 = inlined_call_operand.hbm [shape: f32[8,128], index: 1, kind: output, shape index: {}]
  %s2 = sld [smem:[#allocation0]]
  $region18: #{tpu_custom_call.1} parent=0
    _
  %s4 = ssub.s32 1, %s2
  %s5 = scalar_select 0, %s4, %s2
  $region1: #{tpu_custom_call.1} parent=0
    #allocation2 [shape = 'u8[4096]{0}', space=vmem, size = 0x1000, scoped, tag = 'input window, operand 0, single buffered']
    #allocation3 [shape = 's32[1]{0}', space=sflag, size = 0x4, scoped, tag = 'scoped memory for tpu_custom_call.1']
    #allocation4 [shape = 's32[1]{0}', space=sflag, size = 0x4, scoped, tag = 'scoped memory for tpu_custom_call.1']
    #allocation5 [shape = 'u8[4096]{0}', space=vmem, size = 0x1000, scoped, tag = 'output window, operand 0, single buffered']
    %6 = vsyncpa [#allocation3], 0
    %7 = vsyncpa [#allocation4], 0
    // Predicated region
    $region2: #{tpu_custom_call.1} parent=1 // pred_check
      _
    $region3: #{tpu_custom_call.1} parent=1 // pred_check_branch
      %9 = sbr.rel (0) target = $region5
    $region4: #{tpu_custom_call.1} parent=1 // pred_region
      %11 = vsyncadd [#allocation3], 0
      %s13 = sshll.u32 %s0, 4
      %s14 = int_to_ptr.hbm [resolvable:$true] %s13
      %s15 = sshll.u32 [#allocation2], 4
      %s16 = int_to_ptr.vmem [resolvable:$true] %s15
      %18 = dma.hbm_to_vmem [thread:$0]  %s14, 128, %s16, [#allocation3]
    $region5: #{tpu_custom_call.1} parent=1 // pred_fallthru
      _
    // Predicated region
    $region6: #{tpu_custom_call.1} parent=1 // pred_check
      _
    $region7: #{tpu_custom_call.1} parent=1 // pred_check_branch
      %20 = sbr.rel (0) target = $region9
    $region8: #{tpu_custom_call.1} parent=1 // pred_region
      %22 = dma.done [#allocation3], 128
    $region9: #{tpu_custom_call.1} parent=1 // pred_fallthru
      _
    %v23 = vld [vmem:[#allocation2] sm:$0xff]
    %24 = vrot.lane.b32.xlu0 %v23, 1
    %v25 = vpop.permute.xlu0 %24
    %26 = vst [vmem:[#allocation5] sm:$0xff] %v25
    // Predicated region
    $region10: #{tpu_custom_call.1} parent=1 // pred_check
      _
    $region11: #{tpu_custom_call.1} parent=1 // pred_check_branch
      %28 = sbr.rel (0) target = $region13
    $region12: #{tpu_custom_call.1} parent=1 // pred_region
      %30 = vsyncadd [#allocation4], 0
      %s32 = sshll.u32 [#allocation5], 4
      %s33 = int_to_ptr.vmem [resolvable:$true] %s32
      %s34 = sshll.u32 %s1, 4
      %s35 = int_to_ptr.hbm [resolvable:$true] %s34
      %37 = dma.vmem_to_hbm [thread:$0]  %s33, 128, %s35, [#allocation4]
    $region13: #{tpu_custom_call.1} parent=1 // pred_fallthru
      _
    // Predicated region
    $region14: #{tpu_custom_call.1} parent=1 // pred_check
      _
    $region15: #{tpu_custom_call.1} parent=1 // pred_check_branch
      %39 = sbr.rel (0) target = $region17
    $region16: #{tpu_custom_call.1} parent=1 // pred_region
      %41 = dma.done [#allocation4], 128
    $region17: #{tpu_custom_call.1} parent=1 // pred_fallthru
      _
    %42 = vsyncpa [#allocation3], 1
    %43 = vsyncpa [#allocation4], 1

</llo_original>
